<compile_context>
chip_gen: v7x
topology: tpu7x:2x2x1
jax: 0.10.0
libtpu: 0.0.40
codegen_flags: <defaults>
</compile_context>

<pallas_src>
import numpy as np
import jax
import jax.numpy as jnp
from jax.experimental import pallas as pl
from jax.experimental.pallas import tpu as pltpu

EMB = 32          # embedding_dim (small synthetic example)
VOCAB = 50
SEQ = 16
BATCH = 2
C3, C4, C5 = 64, 128, 256
C_ALL = C3 + C4 + C5            # 448
FEAT = 2 * C_ALL                # 896  ([max3|max4|max5|mean3|mean4|mean5])
NCLASS = 3
K_MAX = 5                       # widest conv kernel; k=3/4 folded weights zero-padded


def _round_up(n, m):
    return (n + m - 1) // m * m


L3, L4, L5 = SEQ - 2, SEQ - 3, SEQ - 4       # true valid-conv output lengths
LW = _round_up(L3, 8)                        # window rows per batch (sublane-aligned) = 16
VPAD = _round_up(K_MAX * VOCAB, 128)         # folded-weight rows, 250 -> 256


def _cnn_kernel(ids_ref, w_ref, b_ref, maxm_ref, meanw_ref, o_ref):
    # ids_ref   : (5*LW, 1) int32   shifted token ids for this batch element
    #                               (rows j*LW+t hold token[t + j])
    # w_ref     : (VPAD, 448) bf16  folded (embedding @ conv-tap) weight
    # b_ref     : (1, 448)   f32    concatenated conv bias
    # maxm_ref  : (LW, 448)  f32    additive max-pool mask (0 valid / -3 invalid)
    # meanw_ref : (LW, 448)  f32    mean-pool weights (1/valid_len valid / 0 invalid)
    # o_ref     : (1, 1, 896) f32   pooled features, lane-dense
    ids = ids_ref[...]                                               # (5*LW, 1)

    # one-hot im2col: row t has a 1 at column j*VOCAB + token[t+j] for each tap j
    col = jax.lax.broadcasted_iota(jnp.int32, (LW, VPAD), 1)
    oh = col == ids[0:LW, :]
    for j in range(1, K_MAX):                                        # static unroll (5)
        oh = jnp.logical_or(oh, col == (ids[j * LW:(j + 1) * LW, :] + j * VOCAB))
    onehot = oh.astype(jnp.bfloat16)                                 # (LW, VPAD)

    # conv3 + conv4 + conv5 + bias + tanh: ONE MXU matmul (f32 accumulation)
    h = jnp.tanh(
        jnp.dot(onehot, w_ref[...], preferred_element_type=jnp.float32)
        + b_ref[...])                                                # (LW, 448) f32

    # masked max / mean pooling over time (static masks, finite sentinel)
    hmax = jnp.max(h + maxm_ref[...], axis=0, keepdims=True)         # (1, 448)
    hmean = jnp.sum(h * meanw_ref[...], axis=0, keepdims=True)       # (1, 448)
    o_ref[...] = jnp.concatenate([hmax, hmean], axis=1).reshape(1, 1, FEAT)


def preprocess_params(params):
    """One-time parameter preprocessing (keep OUT of the per-call jit)."""
    emb = params["embedding"]                                        # (V, E)

    def fold(w, k):
        # PyTorch Conv1d weight (C, E, k) -> per-tap folded (5, V, C) = emb @ W_tap
        c = w.shape[0]
        taps = [emb @ w[:, :, j].T for j in range(k)]
        taps += [jnp.zeros((VOCAB, c), jnp.float32)] * (K_MAX - k)
        return jnp.stack(taps, axis=0)                               # (5, V, C)

    wf = jnp.concatenate(
        [fold(params["w3"], 3), fold(params["w4"], 4), fold(params["w5"], 5)],
        axis=2)                                                      # (5, V, 448)
    wf = wf.reshape(K_MAX * VOCAB, C_ALL)                            # (250, 448)
    wf = jnp.pad(wf, ((0, VPAD - K_MAX * VOCAB), (0, 0)))            # (256, 448)
    bias = jnp.concatenate(
        [params["b3"], params["b4"], params["b5"]]).reshape(1, C_ALL)

    # static pooling constants (depend only on shapes)
    row = np.arange(LW)[:, None]                                     # (LW, 1)
    vlen = np.concatenate(
        [np.full(C3, L3), np.full(C4, L4), np.full(C5, L5)])[None, :]  # (1, 448)
    valid = row < vlen
    max_mask = np.where(valid, 0.0, -3.0).astype(np.float32)         # tanh in [-1, 1]
    mean_w = np.where(valid, 1.0 / vlen, 0.0).astype(np.float32)

    return dict(
        wfold=wf.astype(jnp.bfloat16),
        bias=bias,
        max_mask=jnp.asarray(max_mask),
        mean_w=jnp.asarray(mean_w),
        fcw_t=params["fcw"].T,                                       # (896, 3)
        fcb=params["fcb"],
    )


@jax.jit
def forward(tokens_sb, prep):
    """tokens_sb: (S, B) int32, seq-first like the PyTorch module."""
    S, B = tokens_sb.shape
    pad_t = LW + K_MAX - 1 - S                                       # zero-token pad

    # shifted token ids built in the wrapper (5 ints per window row, tiny)
    tok = jnp.pad(tokens_sb.T, ((0, 0), (0, pad_t)))                 # (B, S+pad)
    shifted = jnp.stack([tok[:, j:j + LW] for j in range(K_MAX)], axis=1)  # (B, 5, LW)
    ids = shifted.reshape(B * K_MAX * LW, 1).astype(jnp.int32)       # (B*5*LW, 1)

    feats = pl.pallas_call(
        _cnn_kernel,
        out_shape=jax.ShapeDtypeStruct((B, 1, FEAT), jnp.float32),
        grid=(B,),
        in_specs=[
            pl.BlockSpec((K_MAX * LW, 1), lambda b: (b, 0)),         # per-batch ids
            pl.BlockSpec((VPAD, C_ALL), lambda b: (0, 0)),           # folded weight
            pl.BlockSpec((1, C_ALL), lambda b: (0, 0)),              # bias
            pl.BlockSpec((LW, C_ALL), lambda b: (0, 0)),             # max mask
            pl.BlockSpec((LW, C_ALL), lambda b: (0, 0)),             # mean weights
        ],
        out_specs=pl.BlockSpec((1, 1, FEAT), lambda b: (b, 0, 0)),
        compiler_params=pltpu.CompilerParams(
            dimension_semantics=("parallel",)),                      # 2 TCs on v7x
    )(ids, prep["wfold"], prep["bias"], prep["max_mask"], prep["mean_w"])

    feats = feats.reshape(B, FEAT)
    # dropout2: identity (eval).  Tiny 896->3 classifier as one XLA dot.
    return feats @ prep["fcw_t"] + prep["fcb"]                       # (B, 3)


def init_params(key):
    """Deterministic synthetic parameters matching the PyTorch __init__ shapes."""
    ks = jax.random.split(key, 10)

    def xavier(k, shape, fan_in, fan_out):
        bound = (6.0 / (fan_in + fan_out)) ** 0.5
        return jax.random.uniform(k, shape, jnp.float32, -bound, bound)

    emb = jax.random.normal(ks[0], (VOCAB, EMB), jnp.float32) * 0.1
    emb = emb.at[0].set(0.0)                                         # padding_idx=0

    # PyTorch layouts: Conv1d weight (C_out, E, k), Linear weight (out, in)
    w3 = xavier(ks[1], (C3, EMB, 3), EMB * 3, C3 * 3)
    w4 = xavier(ks[2], (C4, EMB, 4), EMB * 4, C4 * 4)
    w5 = xavier(ks[3], (C5, EMB, 5), EMB * 5, C5 * 5)
    b3 = jax.random.uniform(ks[4], (C3,), jnp.float32, -0.1, 0.1)
    b4 = jax.random.uniform(ks[5], (C4,), jnp.float32, -0.1, 0.1)
    b5 = jax.random.uniform(ks[6], (C5,), jnp.float32, -0.1, 0.1)
    fcw = xavier(ks[7], (NCLASS, FEAT), FEAT, NCLASS)
    fcb = jax.random.uniform(ks[8], (NCLASS,), jnp.float32, -0.1, 0.1)
    return dict(embedding=emb, w3=w3, b3=b3, w4=w4, b4=b4, w5=w5, b5=b5,
                fcw=fcw, fcb=fcb)


def reference(tokens, p):
    """Pure-JAX reference following the PyTorch NCW conv formulation."""
    emb = jnp.take(p["embedding"], tokens, axis=0)                   # (S, B, E)
    x = jnp.transpose(emb, (1, 2, 0))                                # (B, E, S)

    def conv(w, b):
        y = jax.lax.conv_general_dilated(
            x, w, window_strides=(1,), padding="VALID",
            dimension_numbers=("NCH", "OIH", "NCH"))
        y = jnp.tanh(y + b[None, :, None])
        return jnp.max(y, axis=2), jnp.mean(y, axis=2)

    m3, a3 = conv(p["w3"], p["b3"])
    m4, a4 = conv(p["w4"], p["b4"])
    m5, a5 = conv(p["w5"], p["b5"])
    feat = jnp.concatenate([m3, m4, m5, a3, a4, a5], axis=1)         # (B, 896)
    return feat @ p["fcw"].T + p["fcb"]


if __name__ == "__main__":
    key = jax.random.PRNGKey(0)
    pkey, tkey = jax.random.split(key)
    params = init_params(pkey)
    prep = jax.tree_util.tree_map(jax.block_until_ready, preprocess_params(params))
    tokens = jax.random.randint(tkey, (SEQ, BATCH), 0, VOCAB, dtype=jnp.int32)

    out = jax.block_until_ready(forward(tokens, prep))
    ref = reference(tokens, params)

    assert out.shape == (BATCH, NCLASS), out.shape
    # bf16 MXU operands (f32 accumulation) -> slightly looser tolerance than pure f32
    assert jnp.allclose(out, ref, atol=2e-3, rtol=2e-3), (out, ref)
    print("KERNEL_OK")
</pallas_src>

<mosaic_0001>
module attributes {stable_mosaic.version = 11 : i64} {
  func.func @_cnn_kernel(%arg0: i32, %arg1: memref<80x1xi32, #tpu.memory_space<vmem>>, %arg2: memref<256x448xbf16, #tpu.memory_space<vmem>>, %arg3: memref<1x448xf32, #tpu.memory_space<vmem>>, %arg4: memref<16x448xf32, #tpu.memory_space<vmem>>, %arg5: memref<16x448xf32, #tpu.memory_space<vmem>>, %arg6: memref<1x1x896xf32, #tpu.memory_space<vmem>>) attributes {dimension_semantics = [#tpu.dimension_semantics<parallel>], iteration_bounds = array<i64: 2>, scalar_prefetch = 0 : i64, scratch_operands = 0 : i64, tpu.core_type = #tpu.core_type<tc>, window_params = [{transform_indices = @transform_0, window_bounds = array<i64: 80, 1>}, {pipeline_mode = #tpu.pipeline_mode<synchronous>, transform_indices = @transform_1, window_bounds = array<i64: 256, 448>}, {pipeline_mode = #tpu.pipeline_mode<synchronous>, transform_indices = @transform_2, window_bounds = array<i64: 1, 448>}, {pipeline_mode = #tpu.pipeline_mode<synchronous>, transform_indices = @transform_3, window_bounds = array<i64: 16, 448>}, {pipeline_mode = #tpu.pipeline_mode<synchronous>, transform_indices = @transform_4, window_bounds = array<i64: 16, 448>}, {transform_indices = @transform_5, window_bounds = array<i64: 1, 1, 896>}]} {
    %c0 = arith.constant 0 : index
    %c0_0 = arith.constant 0 : index
    %0 = vector.load %arg1[%c0, %c0_0] : memref<80x1xi32, #tpu.memory_space<vmem>>, vector<80x1xi32>
    %1 = tpu.iota {dimensions = array<i32: 1>} : vector<16x256xi32>
    %2 = vector.extract_strided_slice %0 {offsets = [0, 0], sizes = [16, 1], strides = [1, 1]} : vector<80x1xi32> to vector<16x1xi32>
    %3 = vector.broadcast %2 : vector<16x1xi32> to vector<16x256xi32>
    %4 = arith.cmpi eq, %1, %3 : vector<16x256xi32>
    %5 = vector.extract_strided_slice %0 {offsets = [16, 0], sizes = [16, 1], strides = [1, 1]} : vector<80x1xi32> to vector<16x1xi32>
    %c50_i32 = arith.constant 50 : i32
    %6 = vector.broadcast %c50_i32 : i32 to vector<16x1xi32>
    %7 = arith.addi %5, %6 : vector<16x1xi32>
    %8 = vector.broadcast %7 : vector<16x1xi32> to vector<16x256xi32>
    %9 = arith.cmpi eq, %1, %8 : vector<16x256xi32>
    %10 = arith.ori %4, %9 : vector<16x256xi1>
    %11 = vector.extract_strided_slice %0 {offsets = [32, 0], sizes = [16, 1], strides = [1, 1]} : vector<80x1xi32> to vector<16x1xi32>
    %c100_i32 = arith.constant 100 : i32
    %12 = vector.broadcast %c100_i32 : i32 to vector<16x1xi32>
    %13 = arith.addi %11, %12 : vector<16x1xi32>
    %14 = vector.broadcast %13 : vector<16x1xi32> to vector<16x256xi32>
    %15 = arith.cmpi eq, %1, %14 : vector<16x256xi32>
    %16 = arith.ori %10, %15 : vector<16x256xi1>
    %17 = vector.extract_strided_slice %0 {offsets = [48, 0], sizes = [16, 1], strides = [1, 1]} : vector<80x1xi32> to vector<16x1xi32>
    %c150_i32 = arith.constant 150 : i32
    %18 = vector.broadcast %c150_i32 : i32 to vector<16x1xi32>
    %19 = arith.addi %17, %18 : vector<16x1xi32>
    %20 = vector.broadcast %19 : vector<16x1xi32> to vector<16x256xi32>
    %21 = arith.cmpi eq, %1, %20 : vector<16x256xi32>
    %22 = arith.ori %16, %21 : vector<16x256xi1>
    %23 = vector.extract_strided_slice %0 {offsets = [64, 0], sizes = [16, 1], strides = [1, 1]} : vector<80x1xi32> to vector<16x1xi32>
    %c200_i32 = arith.constant 200 : i32
    %24 = vector.broadcast %c200_i32 : i32 to vector<16x1xi32>
    %25 = arith.addi %23, %24 : vector<16x1xi32>
    %26 = vector.broadcast %25 : vector<16x1xi32> to vector<16x256xi32>
    %27 = arith.cmpi eq, %1, %26 : vector<16x256xi32>
    %28 = arith.ori %22, %27 : vector<16x256xi1>
    %29 = arith.extui %28 : vector<16x256xi1> to vector<16x256xi32>
    %30 = arith.sitofp %29 : vector<16x256xi32> to vector<16x256xf32>
    %31 = arith.truncf %30 : vector<16x256xf32> to vector<16x256xbf16>
    %c0_1 = arith.constant 0 : index
    %c0_2 = arith.constant 0 : index
    %32 = vector.load %arg2[%c0_1, %c0_2] : memref<256x448xbf16, #tpu.memory_space<vmem>>, vector<256x448xbf16>
    %cst = arith.constant dense<0.000000e+00> : vector<16x448xf32>
    %33 = tpu.matmul %31, %32, %cst {dimension_numbers = #tpu.dot_dimension_numbers<[1], [0], [0], [1], [0, 0, 1, 1], [], []>} : vector<16x256xbf16>, vector<256x448xbf16>, vector<16x448xf32> -> vector<16x448xf32>
    %c0_3 = arith.constant 0 : index
    %c0_4 = arith.constant 0 : index
    %34 = vector.load %arg3[%c0_3, %c0_4] : memref<1x448xf32, #tpu.memory_space<vmem>>, vector<1x448xf32>
    %35 = vector.broadcast %34 : vector<1x448xf32> to vector<16x448xf32>
    %36 = arith.addf %33, %35 : vector<16x448xf32>
    %37 = math.tanh %36 : vector<16x448xf32>
    %c0_5 = arith.constant 0 : index
    %c0_6 = arith.constant 0 : index
    %38 = vector.load %arg4[%c0_5, %c0_6] : memref<16x448xf32, #tpu.memory_space<vmem>>, vector<16x448xf32>
    %39 = arith.addf %37, %38 : vector<16x448xf32>
    %cst_7 = arith.constant dense<0xFF800000> : vector<448xf32>
    %40 = vector.multi_reduction <maximumf>, %39, %cst_7 [0] : vector<16x448xf32> to vector<448xf32>
    %41 = vector.shape_cast %40 : vector<448xf32> to vector<1x448xf32>
    %c0_8 = arith.constant 0 : index
    %c0_9 = arith.constant 0 : index
    %42 = vector.load %arg5[%c0_8, %c0_9] : memref<16x448xf32, #tpu.memory_space<vmem>>, vector<16x448xf32>
    %43 = arith.mulf %37, %42 : vector<16x448xf32>
    %cst_10 = arith.constant dense<0.000000e+00> : vector<448xf32>
    %44 = vector.multi_reduction <add>, %43, %cst_10 [0] : vector<16x448xf32> to vector<448xf32>
    %45 = vector.shape_cast %44 : vector<448xf32> to vector<1x448xf32>
    %46 = tpu.concatenate %41, %45 in 1 : vector<1x448xf32>, vector<1x448xf32> -> vector<1x896xf32>
    %47 = vector.shape_cast %46 : vector<1x896xf32> to vector<1x1x896xf32>
    %c0_11 = arith.constant 0 : index
    %c0_12 = arith.constant 0 : index
    %c0_13 = arith.constant 0 : index
    %48 = vector.load %arg6[%c0_11, %c0_12, %c0_13] : memref<1x1x896xf32, #tpu.memory_space<vmem>>, vector<1x1x896xf32>
    tpu.vector_store %arg6[%c0_11, %c0_12, %c0_13], %47 {strides = array<i32>} : memref<1x1x896xf32, #tpu.memory_space<vmem>>, vector<1x1x896xf32>,
    return
  }
  func.func @transform_0(%arg0: i32) -> (i32, i32) {
    %c0_i32 = arith.constant 0 : i32
    %c0_i32_0 = arith.constant 0 : i32
    return %arg0, %c0_i32 : i32, i32
  }
  func.func @transform_1(%arg0: i32) -> (i32, i32) {
    %c0_i32 = arith.constant 0 : i32
    %c0_i32_0 = arith.constant 0 : i32
    %c0_i32_1 = arith.constant 0 : i32
    return %c0_i32, %c0_i32_0 : i32, i32
  }
  func.func @transform_2(%arg0: i32) -> (i32, i32) {
    %c0_i32 = arith.constant 0 : i32
    %c0_i32_0 = arith.constant 0 : i32
    %c0_i32_1 = arith.constant 0 : i32
    return %c0_i32, %c0_i32_0 : i32, i32
  }
  func.func @transform_3(%arg0: i32) -> (i32, i32) {
    %c0_i32 = arith.constant 0 : i32
    %c0_i32_0 = arith.constant 0 : i32
    %c0_i32_1 = arith.constant 0 : i32
    return %c0_i32, %c0_i32_0 : i32, i32
  }
  func.func @transform_4(%arg0: i32) -> (i32, i32) {
    %c0_i32 = arith.constant 0 : i32
    %c0_i32_0 = arith.constant 0 : i32
    %c0_i32_1 = arith.constant 0 : i32
    return %c0_i32, %c0_i32_0 : i32, i32
  }
  func.func @transform_5(%arg0: i32) -> (i32, i32, i32) {
    %c0_i32 = arith.constant 0 : i32
    %c0_i32_0 = arith.constant 0 : i32
    %c0_i32_1 = arith.constant 0 : i32
    return %arg0, %c0_i32, %c0_i32_0 : i32, i32, i32
  }
}

</mosaic_0001>

<llo_original>
// kernel: forward.1
$region0: #{forward.1}
  #allocation0 [shape = 'u32[]', space=smem, size = 0x4, offset = 0x4, fixed_abs, tag = 'smem constant byte address 0x4 - core index']
  #allocation1 [shape = 'u32[144,128]{1,0:T(1,128)}', space=vmem, size = 0x12000, scoped, tag = 'internal scratch']
  %s0 = inlined_call_operand.vmem [shape: s32[160,1], index: 0, kind: input, shape index: {}]
  %s1 = inlined_call_operand.vmem [shape: bf16[256,448], index: 1, kind: input, shape index: {}]
  %s2 = inlined_call_operand.vmem [shape: f32[1,448], index: 2, kind: input, shape index: {}]
  %s3 = inlined_call_operand.vmem [shape: f32[16,448], index: 3, kind: input, shape index: {}]
  %s4 = inlined_call_operand.vmem [shape: f32[16,448], index: 4, kind: input, shape index: {}]
  %s5 = inlined_call_operand.vmem [shape: f32[2,1,896], index: 5, kind: output, shape index: {}]
  %s6 = sld [smem:[#allocation0]]
  $region53: #{forward.1} parent=0
    _
  %s8 = ssub.s32 1, %s6
  %s9 = scalar_select 0, %s8, %s6
  loop: start=0, step=1, limit=4
  $region2: #{forward.1} parent=0 // loop_pre_header
    _
  $region3: #{forward.1} parent=0 // loop_header
    %s11 = sphi 0, %s15
    %p12 = scmp.ge.s32.totalorder %s11, 4
    %s21 = sphi 0, %s23
    %s24 = sphi 0, %s21
    %s25 = sphi 0, %s24
    %s41 = sphi 0, %s25
    %s45 = sphi 0, %s45
    %s47 = sphi 0, %s45
    %s48 = sphi 0, %s47
    %s62 = sphi 0, %s48
    %s66 = sphi 0, %s66
    %s68 = sphi 0, %s66
    %s69 = sphi 0, %s68
    %s83 = sphi 0, %s69
    %s87 = sphi 0, %s87
    %s89 = sphi 0, %s87
    %s90 = sphi 0, %s89
    %s104 = sphi 0, %s90
    %s108 = sphi 0, %s108
    %s110 = sphi 0, %s108
    %s111 = sphi 0, %s110
    %s125 = sphi 0, %s111
    %s131 = sphi 0, %s133
    %s134 = sphi 0, %s131
    %s135 = sphi 0, %s134
    %s151 = sphi 0, %s135
  $region4: #{forward.1} parent=0 // loop_header_branch
    %14 = sbr.rel (%p12) target = $region8
  $region5: #{forward.1} parent=0 // loop_body
    %s16 = ssub.s32 %s11, 1
    %s17 = ssub.s32 %s11, 2
    %s18 = sadd.s32 %s11, 1
    %s19 = ssub.s32 %s11, %s18
    %p20 = scmp.eq.s32.totalorder %s19, 0
    %s22 = sadd.s32 %s21, 1
    %s23 = scalar_select %p20, %s21, %s22
    %p26 = pneg %p20
    %p27 = scmp.eq.s32.totalorder %s11, 1
    %p28 = por %p26, %p27
    %p29 = scmp.ne.s32.totalorder %s21, %s24
    %p30 = scmp.eq.s32.totalorder %s11, 0
    %p31 = por %p29, %p30
    %p32 = scmp.ne.s32.totalorder %s21, %s24
    %p33 = scmp.eq.s32.totalorder %s16, 1
    %p34 = por %p32, %p33
    %p35 = scmp.ne.s32.totalorder %s24, %s25
    %p36 = scmp.eq.s32.totalorder %s16, 0
    %p37 = por %p35, %p36
    %p38 = scmp.ne.s32.totalorder %s24, %s25
    %p39 = scmp.eq.s32.totalorder %s17, 1
    %p40 = por %p38, %p39
    %p42 = scmp.ne.s32.totalorder %s25, %s41
    %p43 = scmp.eq.s32.totalorder %s17, 0
    %p44 = por %p42, %p43
    %s46 = sadd.s32 %s45, 1
    %p49 = scmp.eq.s32.totalorder %s11, 1
    %p50 = scmp.ne.s32.totalorder %s45, %s47
    %p51 = scmp.eq.s32.totalorder %s11, 0
    %p52 = por %p50, %p51
    %p53 = scmp.ne.s32.totalorder %s45, %s47
    %p54 = scmp.eq.s32.totalorder %s16, 1
    %p55 = por %p53, %p54
    %p56 = scmp.ne.s32.totalorder %s47, %s48
    %p57 = scmp.eq.s32.totalorder %s16, 0
    %p58 = por %p56, %p57
    %p59 = scmp.ne.s32.totalorder %s47, %s48
    %p60 = scmp.eq.s32.totalorder %s17, 1
    %p61 = por %p59, %p60
    %p63 = scmp.ne.s32.totalorder %s48, %s62
    %p64 = scmp.eq.s32.totalorder %s17, 0
    %p65 = por %p63, %p64
    %s67 = sadd.s32 %s66, 1
    %p70 = scmp.eq.s32.totalorder %s11, 1
    %p71 = scmp.ne.s32.totalorder %s66, %s68
    %p72 = scmp.eq.s32.totalorder %s11, 0
    %p73 = por %p71, %p72
    %p74 = scmp.ne.s32.totalorder %s66, %s68
    %p75 = scmp.eq.s32.totalorder %s16, 1
    %p76 = por %p74, %p75
    %p77 = scmp.ne.s32.totalorder %s68, %s69
    %p78 = scmp.eq.s32.totalorder %s16, 0
    %p79 = por %p77, %p78
    %p80 = scmp.ne.s32.totalorder %s68, %s69
    %p81 = scmp.eq.s32.totalorder %s17, 1
    %p82 = por %p80, %p81
    %p84 = scmp.ne.s32.totalorder %s69, %s83
    %p85 = scmp.eq.s32.totalorder %s17, 0
    %p86 = por %p84, %p85
    %s88 = sadd.s32 %s87, 1
    %p91 = scmp.eq.s32.totalorder %s11, 1
    %p92 = scmp.ne.s32.totalorder %s87, %s89
    %p93 = scmp.eq.s32.totalorder %s11, 0
    %p94 = por %p92, %p93
    %p95 = scmp.ne.s32.totalorder %s87, %s89
    %p96 = scmp.eq.s32.totalorder %s16, 1
    %p97 = por %p95, %p96
    %p98 = scmp.ne.s32.totalorder %s89, %s90
    %p99 = scmp.eq.s32.totalorder %s16, 0
    %p100 = por %p98, %p99
    %p101 = scmp.ne.s32.totalorder %s89, %s90
    %p102 = scmp.eq.s32.totalorder %s17, 1
    %p103 = por %p101, %p102
    %p105 = scmp.ne.s32.totalorder %s90, %s104
    %p106 = scmp.eq.s32.totalorder %s17, 0
    %p107 = por %p105, %p106
    %s109 = sadd.s32 %s108, 1
    %p112 = scmp.eq.s32.totalorder %s11, 1
    %p113 = scmp.ne.s32.totalorder %s108, %s110
    %p114 = scmp.eq.s32.totalorder %s11, 0
    %p115 = por %p113, %p114
    %p116 = scmp.ne.s32.totalorder %s108, %s110
    %p117 = scmp.eq.s32.totalorder %s16, 1
    %p118 = por %p116, %p117
    %p119 = scmp.ne.s32.totalorder %s110, %s111
    %p120 = scmp.eq.s32.totalorder %s16, 0
    %p121 = por %p119, %p120
    %p122 = scmp.ne.s32.totalorder %s110, %s111
    %p123 = scmp.eq.s32.totalorder %s17, 1
    %p124 = por %p122, %p123
    %p126 = scmp.ne.s32.totalorder %s111, %s125
    %p127 = scmp.eq.s32.totalorder %s17, 0
    %p128 = por %p126, %p127
    %s129 = ssub.s32 %s11, %s18
    %p130 = scmp.eq.s32.totalorder %s129, 0
    %s132 = sadd.s32 %s131, 1
    %s133 = scalar_select %p130, %s131, %s132
    %p136 = pneg %p130
    %p137 = scmp.eq.s32.totalorder %s11, 1
    %p138 = por %p136, %p137
    %p139 = scmp.ne.s32.totalorder %s131, %s134
    %p140 = scmp.eq.s32.totalorder %s11, 0
    %p141 = por %p139, %p140
    %p142 = scmp.ne.s32.totalorder %s131, %s134
    %p143 = scmp.eq.s32.totalorder %s16, 1
    %p144 = por %p142, %p143
    %p145 = scmp.ne.s32.totalorder %s134, %s135
    %p146 = scmp.eq.s32.totalorder %s16, 0
    %p147 = por %p145, %p146
    %p148 = scmp.ne.s32.totalorder %s134, %s135
    %p149 = scmp.eq.s32.totalorder %s17, 1
    %p150 = por %p148, %p149
    %p152 = scmp.ne.s32.totalorder %s135, %s151
    %p153 = scmp.eq.s32.totalorder %s17, 0
    %p154 = por %p152, %p153
    %p155 = scmp.le.s32.totalorder 1, %s11
    %p156 = scmp.lt.s32.totalorder %s11, 3
    %p157 = pnand %p155, %p156
    %p158 = pneg %p157
    // Predicated region
    $region9: #{forward.1} parent=5 // pred_check
      _
    $region10: #{forward.1} parent=5 // pred_check_branch
      %160 = sbr.rel (%p157) target = $region12
    $region11: #{forward.1} parent=5 // pred_region
      %s161 = ssub.s32 %s11, 1
      // Predicated region
      $region13: #{forward.1} parent=11 // pred_check
        %p162 = pneg %p58
      $region14: #{forward.1} parent=11 // pred_check_branch
        %164 = sbr.rel (%p162) target = $region16
      $region15: #{forward.1} parent=11 // pred_region
        _
      $region16: #{forward.1} parent=11 // pred_fallthru
        _
      // Predicated region
      $region17: #{forward.1} parent=11 // pred_check
        %p165 = pneg %p79
      $region18: #{forward.1} parent=11 // pred_check_branch
        %167 = sbr.rel (%p165) target = $region20
      $region19: #{forward.1} parent=11 // pred_region
        _
      $region20: #{forward.1} parent=11 // pred_fallthru
        _
      // Predicated region
      $region21: #{forward.1} parent=11 // pred_check
        %p168 = pneg %p100
      $region22: #{forward.1} parent=11 // pred_check_branch
        %170 = sbr.rel (%p168) target = $region24
      $region23: #{forward.1} parent=11 // pred_region
        _
      $region24: #{forward.1} parent=11 // pred_fallthru
        _
      // Predicated region
      $region25: #{forward.1} parent=11 // pred_check
        %p171 = pneg %p121
      $region26: #{forward.1} parent=11 // pred_check_branch
        %173 = sbr.rel (%p171) target = $region28
      $region27: #{forward.1} parent=11 // pred_region
        _
      $region28: #{forward.1} parent=11 // pred_fallthru
        _
    $region12: #{forward.1} parent=5 // pred_fallthru
      _
    %p174 = scmp.lt.s32.totalorder %s11, 2
    // Predicated region
    $region29: #{forward.1} parent=5 // pred_check
      %p175 = pneg %p174
    $region30: #{forward.1} parent=5 // pred_check_branch
      %177 = sbr.rel (%p175) target = $region32
    $region31: #{forward.1} parent=5 // pred_region
      // Predicated region
      $region33: #{forward.1} parent=31 // pred_check
        %p178 = pneg %p31
      $region34: #{forward.1} parent=31 // pred_check_branch
        %180 = sbr.rel (%p178) target = $region36
      $region35: #{forward.1} parent=31 // pred_region
        %s181 = smul.u32 10, %s11
        %p182 = scmp.lt.s32.totalorder %s181, 19
        %s183 = scalar_select %p182, %s181, 19
        %s184 = smul.addr %s183, 8
        %s185 = scalar_lea.vmem %s0, %s184
        %s186 = smul.u32 10, %s11
      $region36: #{forward.1} parent=31 // pred_fallthru
        _
    $region32: #{forward.1} parent=5 // pred_fallthru
      _
    %p187 = scmp.le.s32.totalorder 1, %s11
    %p188 = scmp.lt.s32.totalorder %s11, 3
    %p189 = pnand %p187, %p188
    %p190 = pneg %p189
    // Predicated region
    $region37: #{forward.1} parent=5 // pred_check
      _
    $region38: #{forward.1} parent=5 // pred_check_branch
      %192 = sbr.rel (%p189) target = $region40
    $region39: #{forward.1} parent=5 // pred_region
      %s193 = ssub.s32 %s11, 1
      %s194 = smul.u32 10, %s16
      %p195 = scmp.lt.s32.totalorder %s194, 19
      %s196 = scalar_select %p195, %s194, 19
      %s197 = smul.addr %s196, 8
      %s198 = scalar_lea.vmem %s0, %s197
      %p199 = pneg %p37
      %p200 = pneg %p34
      %p201 = pneg %p58
      %p202 = pneg %p55
      %p203 = pneg %p79
      %p204 = pneg %p76
      %p205 = pneg %p100
      %p206 = pneg %p97
      %p207 = pneg %p121
      %p208 = pneg %p118
      %p209 = pneg %p147
      %p210 = pneg %p144
      %p211 = scmp.lt.s32.totalorder %s16, 1
      %s212 = scalar_select %p211, %s16, 1
      %s213 = smul.addr %s212, 7
      %s214 = scalar_lea.vmem %s5, %s213
      %s215 = smul.u32 10, %s16
      %p216 = scmp.lt.s32.totalorder %s215, 19
      %s217 = scalar_select %p216, %s215, 19
      %s218 = smul.addr %s217, 8
      %s219 = scalar_lea.vmem %s0, %s218
      %s220 = smul.u32 10, %s16
      %p221 = scmp.lt.s32.totalorder %s16, 1
      %s222 = scalar_select %p221, %s16, 1
      %s223 = smul.addr %s222, 7
      %s224 = scalar_lea.vmem %s5, %s223
      %v225 = vld [vmem:[%s219] sm:$0xff]
      %v226 = vld [vmem:[%s219 + $0x8] sm:$0xff]
      %v227 = vld [vmem:[%s219 + $0x10] sm:$0xff]
      %v228 = vld [vmem:[%s219 + $0x18] sm:$0xff]
      %v229 = vld [vmem:[%s219 + $0x20] sm:$0xff]
      %v230 = vld [vmem:[%s219 + $0x28] sm:$0xff]
      %v231 = vld [vmem:[%s219 + $0x30] sm:$0xff]
      %v232 = vld [vmem:[%s219 + $0x38] sm:$0xff]
      %v233 = vld [vmem:[%s219 + $0x40] sm:$0xff]
      %v234 = vld [vmem:[%s219 + $0x48] sm:$0xff]
      %v235 = vlaneseq
      %v236 = vand.u32 %v235, 127
      %v237 = vadd.s32 %v236, 128
      %238 = vset.pattern.permute.xlu0 0
      %239 = vperm.xlu0 %238, %v225
      %v240 = vpop.permute.xlu0 %239
      %241 = vset.pattern.permute.xlu0 0
      %242 = vperm.xlu0 %241, %v226
      %v243 = vpop.permute.xlu0 %242
      %vm244 = vcmp.eq.s32.totalorder %v236, %v240
      %vm245 = vcmp.eq.s32.totalorder %v237, %v240
      %vm246 = vcmp.eq.s32.totalorder %v236, %v243
      %vm247 = vcmp.eq.s32.totalorder %v237, %v243
      %v248 = vadd.s32 %v227, 50
      %v249 = vadd.s32 %v228, 50
      %250 = vset.pattern.permute.xlu0 0
      %251 = vperm.xlu0 %250, %v248
      %v252 = vpop.permute.xlu0 %251
      %253 = vset.pattern.permute.xlu0 0
      %254 = vperm.xlu0 %253, %v249
      %v255 = vpop.permute.xlu0 %254
      %vm256 = vcmp.eq.s32.totalorder %v236, %v252
      %vm257 = vcmp.eq.s32.totalorder %v237, %v252
      %vm258 = vcmp.eq.s32.totalorder %v236, %v255
      %vm259 = vcmp.eq.s32.totalorder %v237, %v255
      %vm260 = vmor %vm244, %vm256
      %vm261 = vmor %vm245, %vm257
      %vm262 = vmor %vm246, %vm258
      %vm263 = vmor %vm247, %vm259
      %v264 = vadd.s32 %v229, 100
      %v265 = vadd.s32 %v230, 100
      %266 = vset.pattern.permute.xlu0 0
      %267 = vperm.xlu0 %266, %v264
      %v268 = vpop.permute.xlu0 %267
      %269 = vset.pattern.permute.xlu0 0
      %270 = vperm.xlu0 %269, %v265
      %v271 = vpop.permute.xlu0 %270
      %vm272 = vcmp.eq.s32.totalorder %v236, %v268
      %vm273 = vcmp.eq.s32.totalorder %v237, %v268
      %vm274 = vcmp.eq.s32.totalorder %v236, %v271
      %vm275 = vcmp.eq.s32.totalorder %v237, %v271
      %vm276 = vmor %vm260, %vm272
      %vm277 = vmor %vm261, %vm273
      %vm278 = vmor %vm262, %vm274
      %vm279 = vmor %vm263, %vm275
      %v280 = vadd.s32 %v231, 150
      %v281 = vadd.s32 %v232, 150
      %282 = vset.pattern.permute.xlu0 0
      %283 = vperm.xlu0 %282, %v280
      %v284 = vpop.permute.xlu0 %283
      %285 = vset.pattern.permute.xlu0 0
      %286 = vperm.xlu0 %285, %v281
      %v287 = vpop.permute.xlu0 %286
      %vm288 = vcmp.eq.s32.totalorder %v236, %v284
      %vm289 = vcmp.eq.s32.totalorder %v237, %v284
      %vm290 = vcmp.eq.s32.totalorder %v236, %v287
      %vm291 = vcmp.eq.s32.totalorder %v237, %v287
      %vm292 = vmor %vm276, %vm288
      %vm293 = vmor %vm277, %vm289
      %vm294 = vmor %vm278, %vm290
      %vm295 = vmor %vm279, %vm291
      %v296 = vadd.s32 %v233, 200
      %v297 = vadd.s32 %v234, 200
      %298 = vset.pattern.permute.xlu0 0
      %299 = vperm.xlu0 %298, %v296
      %v300 = vpop.permute.xlu0 %299
      %301 = vset.pattern.permute.xlu0 0
      %302 = vperm.xlu0 %301, %v297
      %v303 = vpop.permute.xlu0 %302
      %vm304 = vcmp.eq.s32.totalorder %v236, %v300
      %vm305 = vcmp.eq.s32.totalorder %v237, %v300
      %vm306 = vcmp.eq.s32.totalorder %v236, %v303
      %vm307 = vcmp.eq.s32.totalorder %v237, %v303
      %vm308 = vmor %vm292, %vm304
      %vm309 = vmor %vm293, %vm305
      %vm310 = vmor %vm294, %vm306
      %vm311 = vmor %vm295, %vm307
      %v312 = vsel %vm308, 1, 0
      %v313 = vsel %vm309, 1, 0
      %v314 = vsel %vm310, 1, 0
      %v315 = vsel %vm311, 1, 0
      %v316 = vcvt.s32.f32 %v312
      %v317 = vcvt.s32.f32 %v313
      %v318 = vcvt.s32.f32 %v314
      %v319 = vcvt.s32.f32 %v315
      %v320 = vpack.c.bf16 %v318, %v316
      %v321 = vpack.c.bf16 %v319, %v317
      %v322 = vld [vmem:[%s1] sm:$0xff]
      %v323 = vld [vmem:[%s1 + $0x8] sm:$0xff]
      %v324 = vld [vmem:[%s1 + $0x10] sm:$0xff]
      %v325 = vld [vmem:[%s1 + $0x18] sm:$0xff]
      %v326 = vld [vmem:[%s1 + $0x20] sm:$0xff]
      %v327 = vld [vmem:[%s1 + $0x28] sm:$0xff]
      %v328 = vld [vmem:[%s1 + $0x30] sm:$0xff]
      %v329 = vld [vmem:[%s1 + $0x38] sm:$0xff]
      %v330 = vld [vmem:[%s1 + $0x40] sm:$0xff]
      %v331 = vld [vmem:[%s1 + $0x48] sm:$0xff]
      %v332 = vld [vmem:[%s1 + $0x50] sm:$0xff]
      %v333 = vld [vmem:[%s1 + $0x58] sm:$0xff]
      %v334 = vld [vmem:[%s1 + $0x60] sm:$0xff]
      %v335 = vld [vmem:[%s1 + $0x68] sm:$0xff]
      %v336 = vld [vmem:[%s1 + $0x70] sm:$0xff]
      %v337 = vld [vmem:[%s1 + $0x78] sm:$0xff]
      %v338 = vld [vmem:[%s1 + $0x80] sm:$0xff]
      %v339 = vld [vmem:[%s1 + $0x88] sm:$0xff]
      %v340 = vld [vmem:[%s1 + $0x90] sm:$0xff]
      %v341 = vld [vmem:[%s1 + $0x98] sm:$0xff]
      %v342 = vld [vmem:[%s1 + $0xa0] sm:$0xff]
      %v343 = vld [vmem:[%s1 + $0xa8] sm:$0xff]
      %v344 = vld [vmem:[%s1 + $0xb0] sm:$0xff]
      %v345 = vld [vmem:[%s1 + $0xb8] sm:$0xff]
      %v346 = vld [vmem:[%s1 + $0xc0] sm:$0xff]
      %v347 = vld [vmem:[%s1 + $0xc8] sm:$0xff]
      %v348 = vld [vmem:[%s1 + $0xd0] sm:$0xff]
      %v349 = vld [vmem:[%s1 + $0xd8] sm:$0xff]
      %v350 = vld [vmem:[%s1 + $0xe0] sm:$0xff]
      %v351 = vld [vmem:[%s1 + $0xe8] sm:$0xff]
      %v352 = vld [vmem:[%s1 + $0xf0] sm:$0xff]
      %v353 = vld [vmem:[%s1 + $0xf8] sm:$0xff]
      %v354 = vld [vmem:[%s1 + $0x100] sm:$0xff]
      %v355 = vld [vmem:[%s1 + $0x108] sm:$0xff]
      %v356 = vld [vmem:[%s1 + $0x110] sm:$0xff]
      %v357 = vld [vmem:[%s1 + $0x118] sm:$0xff]
      %v358 = vld [vmem:[%s1 + $0x120] sm:$0xff]
      %v359 = vld [vmem:[%s1 + $0x128] sm:$0xff]
      %v360 = vld [vmem:[%s1 + $0x130] sm:$0xff]
      %v361 = vld [vmem:[%s1 + $0x138] sm:$0xff]
      %v362 = vld [vmem:[%s1 + $0x140] sm:$0xff]
      %v363 = vld [vmem:[%s1 + $0x148] sm:$0xff]
      %v364 = vld [vmem:[%s1 + $0x150] sm:$0xff]
      %v365 = vld [vmem:[%s1 + $0x158] sm:$0xff]
      %v366 = vld [vmem:[%s1 + $0x160] sm:$0xff]
      %v367 = vld [vmem:[%s1 + $0x168] sm:$0xff]
      %v368 = vld [vmem:[%s1 + $0x170] sm:$0xff]
      %v369 = vld [vmem:[%s1 + $0x178] sm:$0xff]
      %v370 = vld [vmem:[%s1 + $0x180] sm:$0xff]
      %v371 = vld [vmem:[%s1 + $0x188] sm:$0xff]
      %v372 = vld [vmem:[%s1 + $0x190] sm:$0xff]
      %v373 = vld [vmem:[%s1 + $0x198] sm:$0xff]
      %v374 = vld [vmem:[%s1 + $0x1a0] sm:$0xff]
      %v375 = vld [vmem:[%s1 + $0x1a8] sm:$0xff]
      %v376 = vld [vmem:[%s1 + $0x1b0] sm:$0xff]
      %v377 = vld [vmem:[%s1 + $0x1b8] sm:$0xff]
      %v378 = vld [vmem:[%s1 + $0x1c0] sm:$0xff]
      %v379 = vld [vmem:[%s1 + $0x1c8] sm:$0xff]
      %v380 = vld [vmem:[%s1 + $0x1d0] sm:$0xff]
      %v381 = vld [vmem:[%s1 + $0x1d8] sm:$0xff]
      %v382 = vld [vmem:[%s1 + $0x1e0] sm:$0xff]
      %v383 = vld [vmem:[%s1 + $0x1e8] sm:$0xff]
      %v384 = vld [vmem:[%s1 + $0x1f0] sm:$0xff]
      %v385 = vld [vmem:[%s1 + $0x1f8] sm:$0xff]
      %v386 = vld [vmem:[%s2] sm:$0xf]
      %v388 = vlaneseq
      %v389 = vshrl.u32 %v388, 7
      %v390 = vsub.s32 0, %v389
      %v391 = vrot.slane %v386, %v390
      %v392 = vlaneseq
      %v393 = vshrl.u32 %v392, 7
      %v394 = vsub.s32 1, %v393
      %v395 = vrot.slane %v386, %v394
      %v396 = vlaneseq
      %v397 = vshrl.u32 %v396, 7
      %v398 = vsub.s32 2, %v397
      %v399 = vrot.slane %v386, %v398
      %v400 = vlaneseq
      %v401 = vshrl.u32 %v400, 7
      %v402 = vsub.s32 3, %v401
      %v403 = vrot.slane %v386, %v402
      %v472 = vunpack.c.l.b16 %v322
      %v473 = vunpack.c.h.b16 %v322
      %v474 = vunpack.c.l.b16 %v323
      %v475 = vunpack.c.h.b16 %v323
      %v476 = vunpack.c.l.b16 %v324
      %v477 = vunpack.c.h.b16 %v324
      %v478 = vunpack.c.l.b16 %v325
      %v479 = vunpack.c.h.b16 %v325
      %v480 = vunpack.c.l.b16 %v326
      %v481 = vunpack.c.h.b16 %v326
      %v482 = vunpack.c.l.b16 %v327
      %v483 = vunpack.c.h.b16 %v327
      %v484 = vunpack.c.l.b16 %v328
      %v485 = vunpack.c.h.b16 %v328
      %v486 = vunpack.c.l.b16 %v329
      %v487 = vunpack.c.h.b16 %v329
      %v488 = vunpack.c.l.b16 %v330
      %v489 = vunpack.c.h.b16 %v330
      %v490 = vunpack.c.l.b16 %v331
      %v491 = vunpack.c.h.b16 %v331
      %v492 = vunpack.c.l.b16 %v332
      %v493 = vunpack.c.h.b16 %v332
      %v494 = vunpack.c.l.b16 %v333
      %v495 = vunpack.c.h.b16 %v333
      %v496 = vunpack.c.l.b16 %v334
      %v497 = vunpack.c.h.b16 %v334
      %v498 = vunpack.c.l.b16 %v335
      %v499 = vunpack.c.h.b16 %v335
      %v500 = vunpack.c.l.b16 %v336
      %v501 = vunpack.c.h.b16 %v336
      %v502 = vunpack.c.l.b16 %v337
      %v503 = vunpack.c.h.b16 %v337
      %v504 = vunpack.c.l.b16 %v338
      %v505 = vunpack.c.h.b16 %v338
      %v506 = vunpack.c.l.b16 %v339
      %v507 = vunpack.c.h.b16 %v339
      %v508 = vunpack.c.l.b16 %v340
      %v509 = vunpack.c.h.b16 %v340
      %v510 = vunpack.c.l.b16 %v341
      %v511 = vunpack.c.h.b16 %v341
      %v512 = vunpack.c.l.b16 %v342
      %v513 = vunpack.c.h.b16 %v342
      %v514 = vunpack.c.l.b16 %v343
      %v515 = vunpack.c.h.b16 %v343
      %v516 = vunpack.c.l.b16 %v344
      %v517 = vunpack.c.h.b16 %v344
      %v518 = vunpack.c.l.b16 %v345
      %v519 = vunpack.c.h.b16 %v345
      %v520 = vunpack.c.l.b16 %v346
      %v521 = vunpack.c.h.b16 %v346
      %v522 = vunpack.c.l.b16 %v347
      %v523 = vunpack.c.h.b16 %v347
      %v524 = vunpack.c.l.b16 %v348
      %v525 = vunpack.c.h.b16 %v348
      %v526 = vunpack.c.l.b16 %v349
      %v527 = vunpack.c.h.b16 %v349
      %v528 = vunpack.c.l.b16 %v350
      %v529 = vunpack.c.h.b16 %v350
      %v530 = vunpack.c.l.b16 %v351
      %v531 = vunpack.c.h.b16 %v351
      %v532 = vunpack.c.l.b16 %v352
      %v533 = vunpack.c.h.b16 %v352
      %v534 = vunpack.c.l.b16 %v353
      %v535 = vunpack.c.h.b16 %v353
      %v536 = vunpack.c.l.b16 %v354
      %v537 = vunpack.c.h.b16 %v354
      %v538 = vunpack.c.l.b16 %v355
      %v539 = vunpack.c.h.b16 %v355
      %v540 = vunpack.c.l.b16 %v356
      %v541 = vunpack.c.h.b16 %v356
      %v542 = vunpack.c.l.b16 %v357
      %v543 = vunpack.c.h.b16 %v357
      %v544 = vunpack.c.l.b16 %v358
      %v545 = vunpack.c.h.b16 %v358
      %v546 = vunpack.c.l.b16 %v359
      %v547 = vunpack.c.h.b16 %v359
      %v548 = vunpack.c.l.b16 %v360
      %v549 = vunpack.c.h.b16 %v360
      %v550 = vunpack.c.l.b16 %v361
      %v551 = vunpack.c.h.b16 %v361
      %v552 = vunpack.c.l.b16 %v362
      %v553 = vunpack.c.h.b16 %v362
      %v554 = vunpack.c.l.b16 %v363
      %v555 = vunpack.c.h.b16 %v363
      %v556 = vunpack.c.l.b16 %v364
      %v557 = vunpack.c.h.b16 %v364
      %v558 = vunpack.c.l.b16 %v365
      %v559 = vunpack.c.h.b16 %v365
      %v560 = vunpack.c.l.b16 %v366
      %v561 = vunpack.c.h.b16 %v366
      %v562 = vunpack.c.l.b16 %v367
      %v563 = vunpack.c.h.b16 %v367
      %v564 = vunpack.c.l.b16 %v368
      %v565 = vunpack.c.h.b16 %v368
      %v566 = vunpack.c.l.b16 %v369
      %v567 = vunpack.c.h.b16 %v369
      %v568 = vunpack.c.l.b16 %v370
      %v569 = vunpack.c.h.b16 %v370
      %v570 = vunpack.c.l.b16 %v371
      %v571 = vunpack.c.h.b16 %v371
      %v572 = vunpack.c.l.b16 %v372
      %v573 = vunpack.c.h.b16 %v372
      %v574 = vunpack.c.l.b16 %v373
      %v575 = vunpack.c.h.b16 %v373
      %v576 = vunpack.c.l.b16 %v374
      %v577 = vunpack.c.h.b16 %v374
      %v578 = vunpack.c.l.b16 %v375
      %v579 = vunpack.c.h.b16 %v375
      %v580 = vunpack.c.l.b16 %v376
      %v581 = vunpack.c.h.b16 %v376
      %v582 = vunpack.c.l.b16 %v377
      %v583 = vunpack.c.h.b16 %v377
      %v584 = vunpack.c.l.b16 %v378
      %v585 = vunpack.c.h.b16 %v378
      %v586 = vunpack.c.l.b16 %v379
      %v587 = vunpack.c.h.b16 %v379
      %v588 = vunpack.c.l.b16 %v380
      %v589 = vunpack.c.h.b16 %v380
      %v590 = vunpack.c.l.b16 %v381
      %v591 = vunpack.c.h.b16 %v381
      %v592 = vunpack.c.l.b16 %v382
      %v593 = vunpack.c.h.b16 %v382
      %v594 = vunpack.c.l.b16 %v383
      %v595 = vunpack.c.h.b16 %v383
      %v596 = vunpack.c.l.b16 %v384
      %v597 = vunpack.c.h.b16 %v384
      %v598 = vunpack.c.l.b16 %v385
      %v599 = vunpack.c.h.b16 %v385
      %v600 = vpack.c.b16 %v476, %v472
      %v601 = vpack.c.b16 %v477, %v473
      %v602 = vpack.c.b16 %v478, %v474
      %v603 = vpack.c.b16 %v479, %v475
      %v604 = vpack.c.b16 %v484, %v480
      %v605 = vpack.c.b16 %v485, %v481
      %v606 = vpack.c.b16 %v486, %v482
      %v607 = vpack.c.b16 %v487, %v483
      %v608 = vpack.c.b16 %v492, %v488
      %v609 = vpack.c.b16 %v493, %v489
      %v610 = vpack.c.b16 %v494, %v490
      %v611 = vpack.c.b16 %v495, %v491
      %v612 = vpack.c.b16 %v500, %v496
      %v613 = vpack.c.b16 %v501, %v497
      %v614 = vpack.c.b16 %v502, %v498
      %v615 = vpack.c.b16 %v503, %v499
      %v616 = vpack.c.b16 %v508, %v504
      %v617 = vpack.c.b16 %v509, %v505
      %v618 = vpack.c.b16 %v510, %v506
      %v619 = vpack.c.b16 %v511, %v507
      %v620 = vpack.c.b16 %v516, %v512
      %v621 = vpack.c.b16 %v517, %v513
      %v622 = vpack.c.b16 %v518, %v514
      %v623 = vpack.c.b16 %v519, %v515
      %v624 = vpack.c.b16 %v524, %v520
      %v625 = vpack.c.b16 %v525, %v521
      %v626 = vpack.c.b16 %v526, %v522
      %v627 = vpack.c.b16 %v527, %v523
      %v628 = vpack.c.b16 %v532, %v528
      %v629 = vpack.c.b16 %v533, %v529
      %v630 = vpack.c.b16 %v534, %v530
      %v631 = vpack.c.b16 %v535, %v531
      %v632 = vpack.c.b16 %v540, %v536
      %v633 = vpack.c.b16 %v541, %v537
      %v634 = vpack.c.b16 %v542, %v538
      %v635 = vpack.c.b16 %v543, %v539
      %v636 = vpack.c.b16 %v548, %v544
      %v637 = vpack.c.b16 %v549, %v545
      %v638 = vpack.c.b16 %v550, %v546
      %v639 = vpack.c.b16 %v551, %v547
      %v640 = vpack.c.b16 %v556, %v552
      %v641 = vpack.c.b16 %v557, %v553
      %v642 = vpack.c.b16 %v558, %v554
      %v643 = vpack.c.b16 %v559, %v555
      %v644 = vpack.c.b16 %v564, %v560
      %v645 = vpack.c.b16 %v565, %v561
      %v646 = vpack.c.b16 %v566, %v562
      %v647 = vpack.c.b16 %v567, %v563
      %v648 = vpack.c.b16 %v572, %v568
      %v649 = vpack.c.b16 %v573, %v569
      %v650 = vpack.c.b16 %v574, %v570
      %v651 = vpack.c.b16 %v575, %v571
      %v652 = vpack.c.b16 %v580, %v576
      %v653 = vpack.c.b16 %v581, %v577
      %v654 = vpack.c.b16 %v582, %v578
      %v655 = vpack.c.b16 %v583, %v579
      %v656 = vpack.c.b16 %v588, %v584
      %v657 = vpack.c.b16 %v589, %v585
      %v658 = vpack.c.b16 %v590, %v586
      %v659 = vpack.c.b16 %v591, %v587
      %v660 = vpack.c.b16 %v596, %v592
      %v661 = vpack.c.b16 %v597, %v593
      %v662 = vpack.c.b16 %v598, %v594
      %v663 = vpack.c.b16 %v599, %v595
      %728 = vmatprep.subr.bf16.mxu0 %v601
      %729 = vmatpush1.bf16.msra.mxu0 %v600
      %730 = vmatprep.subr.bf16.mxu0 %v605
      %731 = vmatpush1.bf16.msra.mxu0 %v604
      %732 = vmatprep.subr.bf16.mxu0 %v609
      %733 = vmatpush1.bf16.msra.mxu0 %v608
      %734 = vmatprep.subr.bf16.mxu0 %v613
      %735 = vmatpush1.bf16.msra.mxu0 %v612
      %736 = vmatprep.subr.bf16.mxu0 %v617
      %737 = vmatpush1.bf16.msra.mxu0 %v616
      %738 = vmatprep.subr.bf16.mxu0 %v621
      %739 = vmatpush1.bf16.msra.mxu0 %v620
      %740 = vmatprep.subr.bf16.mxu0 %v625
      %741 = vmatpush1.bf16.msra.mxu0 %v624
      %742 = vmatprep.subr.bf16.mxu0 %v629
      %743 = vmatpush1.bf16.msra.mxu0 %v628
      %744 = vmatprep.subr.bf16.mxu0 %v633
      %745 = vmatpush1.bf16.msra.mxu0 %v632
      %746 = vmatprep.subr.bf16.mxu0 %v637
      %747 = vmatpush1.bf16.msra.mxu0 %v636
      %748 = vmatprep.subr.bf16.mxu0 %v641
      %749 = vmatpush1.bf16.msra.mxu0 %v640
      %750 = vmatprep.subr.bf16.mxu0 %v645
      %751 = vmatpush1.bf16.msra.mxu0 %v644
      %752 = vmatprep.subr.bf16.mxu0 %v649
      %753 = vmatpush1.bf16.msra.mxu0 %v648
      %754 = vmatprep.subr.bf16.mxu0 %v653
      %755 = vmatpush1.bf16.msra.mxu0 %v652
      %756 = vmatprep.subr.bf16.mxu0 %v657
      %757 = vmatpush1.bf16.msra.mxu0 %v656
      %758 = vmatprep.subr.bf16.mxu0 %v661
      %759 = vmatpush1.bf16.msra.mxu0 %v660
      %760 = vmatprep.mubr.bf16.mxu0 %v321
      %761 = vmatmul.mubr.bf16.gmra.mrb[0].mxu0 %v320
      %v762 = vpop.f32.mrb[0].mxu0
      %v763 = vadd.f32 %v391, %v762
      %v764 = vpop.f32.mrb[0].mxu0
      %v765 = vadd.f32 %v395, %v764
      %v766 = vpop.f32.mrb[0].mxu0
      %v767 = vadd.f32 %v391, %v766
      %v768 = vpop.f32.mrb[0].mxu0
      %v769 = vadd.f32 %v395, %v768
      %770 = vdwg.mxu0
      %771 = vmatprep.subr.bf16.mxu0 %v603
      %772 = vmatpush1.bf16.msra.mxu0 %v602
      %773 = vmatprep.subr.bf16.mxu0 %v607
      %774 = vmatpush1.bf16.msra.mxu0 %v606
      %775 = vmatprep.subr.bf16.mxu0 %v611
      %776 = vmatpush1.bf16.msra.mxu0 %v610
      %777 = vmatprep.subr.bf16.mxu0 %v615
      %778 = vmatpush1.bf16.msra.mxu0 %v614
      %779 = vmatprep.subr.bf16.mxu0 %v619
      %780 = vmatpush1.bf16.msra.mxu0 %v618
      %781 = vmatprep.subr.bf16.mxu0 %v623
      %782 = vmatpush1.bf16.msra.mxu0 %v622
      %783 = vmatprep.subr.bf16.mxu0 %v627
      %784 = vmatpush1.bf16.msra.mxu0 %v626
      %785 = vmatprep.subr.bf16.mxu0 %v631
      %786 = vmatpush1.bf16.msra.mxu0 %v630
      %787 = vmatprep.subr.bf16.mxu0 %v635
      %788 = vmatpush1.bf16.msra.mxu0 %v634
      %789 = vmatprep.subr.bf16.mxu0 %v639
      %790 = vmatpush1.bf16.msra.mxu0 %v638
      %791 = vmatprep.subr.bf16.mxu0 %v643
      %792 = vmatpush1.bf16.msra.mxu0 %v642
      %793 = vmatprep.subr.bf16.mxu0 %v647
      %794 = vmatpush1.bf16.msra.mxu0 %v646
      %795 = vmatprep.subr.bf16.mxu0 %v651
      %796 = vmatpush1.bf16.msra.mxu0 %v650
      %797 = vmatprep.subr.bf16.mxu0 %v655
      %798 = vmatpush1.bf16.msra.mxu0 %v654
      %799 = vmatprep.subr.bf16.mxu0 %v659
      %800 = vmatpush1.bf16.msra.mxu0 %v658
      %801 = vmatprep.subr.bf16.mxu0 %v663
      %802 = vmatpush1.bf16.msra.mxu0 %v662
      %803 = vmatprep.mubr.bf16.mxu0 %v321
      %804 = vmatmul.mubr.bf16.gmra.mrb[0].mxu0 %v320
      %v805 = vpop.f32.mrb[0].mxu0
      %v806 = vadd.f32 %v399, %v805
      %v807 = vpop.f32.mrb[0].mxu0
      %v808 = vadd.f32 %v403, %v807
      %v809 = vpop.f32.mrb[0].mxu0
      %v810 = vadd.f32 %v399, %v809
      %v811 = vpop.f32.mrb[0].mxu0
      %v812 = vadd.f32 %v403, %v811
      %813 = vdwg.mxu0
      %v814 = vtanh.pop %v763
      %v815 = vtanh.pop %v765
      %v816 = vtanh.pop %v806
      %v817 = vtanh.pop %v808
      %v818 = vtanh.pop %v767
      %v819 = vtanh.pop %v769
      %v820 = vtanh.pop %v810
      %v821 = vtanh.pop %v812
      %v822 = vld [vmem:[%s3] sm:$0xff]
      %v823 = vld [vmem:[%s3 + $0x8] sm:$0xff]
      %v824 = vld [vmem:[%s3 + $0x10] sm:$0xff]
      %v825 = vld [vmem:[%s3 + $0x18] sm:$0xff]
      %v826 = vld [vmem:[%s3 + $0x20] sm:$0xff]
      %v827 = vld [vmem:[%s3 + $0x28] sm:$0xff]
      %v828 = vld [vmem:[%s3 + $0x30] sm:$0xff]
      %v829 = vld [vmem:[%s3 + $0x38] sm:$0xff]
      %v830 = vadd.f32 %v814, %v822
      %v831 = vadd.f32 %v815, %v823
      %v832 = vadd.f32 %v816, %v824
      %v833 = vadd.f32 %v817, %v825
      %v834 = vadd.f32 %v818, %v826
      %v835 = vadd.f32 %v819, %v827
      %v836 = vadd.f32 %v820, %v828
      %v837 = vadd.f32 %v821, %v829
      %v838 = vmax.f32 %v830, %v834
      %v839 = vrot.slane %v838, 4
      %v840 = vmax.f32 %v838, %v839
      %v841 = vrot.slane %v840, 2
      %v842 = vmax.f32 %v840, %v841
      %v843 = vrot.slane %v842, 1
      %v844 = vmax.f32 %v842, %v843
      %v845 = vmax.f32 %v831, %v835
      %v846 = vrot.slane %v845, 4
      %v847 = vmax.f32 %v845, %v846
      %v848 = vrot.slane %v847, 2
      %v849 = vmax.f32 %v847, %v848
      %v850 = vrot.slane %v849, 1
      %v851 = vmax.f32 %v849, %v850
      %v852 = vmax.f32 %v832, %v836
      %v853 = vrot.slane %v852, 4
      %v854 = vmax.f32 %v852, %v853
      %v855 = vrot.slane %v854, 2
      %v856 = vmax.f32 %v854, %v855
      %v857 = vrot.slane %v856, 1
      %v858 = vmax.f32 %v856, %v857
      %vm859 = vcmask 523264
      %v860 = vsel %vm859, %v833, -inf
      %v861 = vsel %vm859, %v837, -inf
      %v862 = vmax.f32 %v860, %v861
      %v863 = vrot.slane %v862, 4
      %v864 = vmax.f32 %v862, %v863
      %v865 = vrot.slane %v864, 2
      %v866 = vmax.f32 %v864, %v865
      %v867 = vrot.slane %v866, 1
      %v868 = vmax.f32 %v866, %v867
      %v869 = vld [vmem:[%s4] sm:$0xff]
      %v870 = vld [vmem:[%s4 + $0x8] sm:$0xff]
      %v871 = vld [vmem:[%s4 + $0x10] sm:$0xff]
      %v872 = vld [vmem:[%s4 + $0x18] sm:$0xff]
      %v873 = vld [vmem:[%s4 + $0x20] sm:$0xff]
      %v874 = vld [vmem:[%s4 + $0x28] sm:$0xff]
      %v875 = vld [vmem:[%s4 + $0x30] sm:$0xff]
      %v876 = vld [vmem:[%s4 + $0x38] sm:$0xff]
      %v877 = vmul.f32 %v814, %v869
      %v878 = vmul.f32 %v815, %v870
      %v879 = vmul.f32 %v816, %v871
      %v880 = vmul.f32 %v817, %v872
      %v881 = vmul.f32 %v818, %v873
      %v882 = vmul.f32 %v819, %v874
      %v883 = vmul.f32 %v820, %v875
      %v884 = vmul.f32 %v821, %v876
      %v885 = vadd.f32 %v877, %v881
      %v886 = vrot.slane %v885, 4
      %v887 = vadd.f32 %v885, %v886
      %v888 = vrot.slane %v887, 2
      %v889 = vadd.f32 %v887, %v888
      %v890 = vrot.slane %v889, 1
      %v891 = vadd.f32 %v889, %v890
      %v892 = vadd.f32 %v878, %v882
      %v893 = vrot.slane %v892, 4
      %v894 = vadd.f32 %v892, %v893
      %v895 = vrot.slane %v894, 2
      %v896 = vadd.f32 %v894, %v895
      %v897 = vrot.slane %v896, 1
      %v898 = vadd.f32 %v896, %v897
      %v899 = vadd.f32 %v879, %v883
      %v900 = vrot.slane %v899, 4
      %v901 = vadd.f32 %v899, %v900
      %v902 = vrot.slane %v901, 2
      %v903 = vadd.f32 %v901, %v902
      %v904 = vrot.slane %v903, 1
      %v905 = vadd.f32 %v903, %v904
      %v906 = vsel %vm859, %v880, 0.0
      %v907 = vsel %vm859, %v884, 0.0
      %v908 = vadd.f32 %v906, %v907
      %v909 = vrot.slane %v908, 4
      %v910 = vadd.f32 %v908, %v909
      %v911 = vrot.slane %v910, 2
      %v912 = vadd.f32 %v910, %v911
      %v913 = vrot.slane %v912, 1
      %v914 = vadd.f32 %v912, %v913
      %919 = vrot.lane.b32.xlu0 %v891, 64
      %v920 = vpop.permute.xlu0 %919
      %921 = vrot.lane.b32.xlu0 %v898, 64
      %v922 = vpop.permute.xlu0 %921
      %923 = vrot.lane.b32.xlu0 %v905, 64
      %v924 = vpop.permute.xlu0 %923
      %925 = vrot.lane.b32.xlu0 %v914, 64
      %v926 = vpop.permute.xlu0 %925
      %v927 = vsel %vm859, %v920, %v922
      %v928 = vsel %vm859, %v922, %v924
      %v929 = vsel %vm859, %v924, %v926
      %v931 = vsel %vm859, %v868, %v920
      %v936 = vcombine.low %v844, %v851
      %v937 = vcombine.low %v858, %v931
      %v938 = vcombine.low %v927, %v928
      %v940 = vunpack.c.l.s4 1966171168
      %v941 = vunpack.c.0.s8 %v940
      %v942 = vlaneseq
      %v943 = vshrl.u32 %v942, 7
      %v944 = vsub.s32 %v941, %v943
      %v945 = vrot.slane %v936, %v944
      %v947 = vunpack.c.l.s4 1966171168
      %v948 = vunpack.c.0.s8 %v947
      %v949 = vlaneseq
      %v950 = vshrl.u32 %v949, 7
      %v951 = vsub.s32 %v948, %v950
      %v952 = vrot.slane %v937, %v951
      %v954 = vunpack.c.l.s4 1966171168
      %v955 = vunpack.c.0.s8 %v954
      %v956 = vlaneseq
      %v957 = vshrl.u32 %v956, 7
      %v958 = vsub.s32 %v955, %v957
      %v959 = vrot.slane %v938, %v958
      %v961 = vunpack.c.l.s4 1966171168
      %v962 = vunpack.c.0.s8 %v961
      %v963 = vlaneseq
      %v964 = vshrl.u32 %v963, 7
      %v965 = vsub.s32 %v962, %v964
      %v966 = vrot.slane %v929, %v965
      %v967 = vcombine.low %v945, %v952
      %v968 = vcombine.low %v959, %v966
      %v970 = vunpack.c.l.s4 1966171168
      %v971 = vunpack.c.0.s8 %v970
      %v972 = vlaneseq
      %v973 = vshrl.u32 %v972, 7
      %v974 = vsub.s32 %v971, %v973
      %v975 = vrot.slane %v967, %v974
      %v977 = vunpack.c.l.s4 1966171168
      %v978 = vunpack.c.0.s8 %v977
      %v979 = vlaneseq
      %v980 = vshrl.u32 %v979, 7
      %v981 = vsub.s32 %v978, %v980
      %v982 = vrot.slane %v968, %v981
      %v983 = vcombine.low %v975, %v982
      %v985 = vlaneseq
      %vm986 = vcmp.ge.s32.totalorder %v985, 0
      %vm987 = vcmp.lt.s32.totalorder %v985, 896
      %vm988 = vmand %vm986, %vm987
      %989 = vst.msk [vmem:[%s224] sm:$0x7f] %vm988, %v983
      %p990 = scmp.lt.s32.totalorder %s16, 1
      %s991 = scalar_select %p990, %s16, 1
      %s992 = smul.addr %s991, 7
      %s993 = scalar_lea.vmem %s5, %s992
      // Predicated region
      $region41: #{forward.1} parent=39 // pred_check
        %p994 = pneg %p144
      $region42: #{forward.1} parent=39 // pred_check_branch
        %996 = sbr.rel (%p994) target = $region44
      $region43: #{forward.1} parent=39 // pred_region
        _
      $region44: #{forward.1} parent=39 // pred_fallthru
        _
    $region40: #{forward.1} parent=5 // pred_fallthru
      _
    %p997 = scmp.le.s32.totalorder 2, %s11
    // Predicated region
    $region45: #{forward.1} parent=5 // pred_check
      %p998 = pneg %p997
    $region46: #{forward.1} parent=5 // pred_check_branch
      %1000 = sbr.rel (%p998) target = $region48
    $region47: #{forward.1} parent=5 // pred_region
      %s1001 = ssub.s32 %s11, 2
      // Predicated region
      $region49: #{forward.1} parent=47 // pred_check
        %p1002 = pneg %p150
      $region50: #{forward.1} parent=47 // pred_check_branch
        %1004 = sbr.rel (%p1002) target = $region52
      $region51: #{forward.1} parent=47 // pred_region
        %p1005 = scmp.lt.s32.totalorder %s17, 1
        %s1006 = scalar_select %p1005, %s17, 1
        %s1007 = smul.addr %s1006, 7
        %s1008 = scalar_lea.vmem %s5, %s1007
      $region52: #{forward.1} parent=47 // pred_fallthru
        _
    $region48: #{forward.1} parent=5 // pred_fallthru
      _
  $region6: #{forward.1} parent=0 // loop_footer
    %s15 = sadd.s32 1, %s11
  $region7: #{forward.1} parent=0 // loop_footer_branch
    %10 = sbr.rel target = $region3
  $region8: #{forward.1} parent=0 // loop_exit
    _

</llo_original>
